<compile_context>
chip_gen: v6e
topology: v6e:2x2x1
jax: 0.10.0
libtpu: 0.0.40
codegen_flags: <defaults>
</compile_context>

<pallas_src>
import functools

import jax
import jax.numpy as jnp
from jax.experimental import pallas as pl
from jax.experimental.pallas import tpu as pltpu

_LANE = 128
_SUBLANE = 8
_X_BUF_BYTES = 8 * 1024 * 1024     # per-buffer (lane-padded) x tile target; x2 when double-buffered
_CHUNK_BYTES = 128 * 1024          # in-kernel row-chunk target (bounds live vreg footprint)
_VMEM_LIMIT = 48 * 1024 * 1024     # > v5e's 16 MiB scoped default, < v7x's 64 MiB physical


def _round_up(x, m):
    return ((x + m - 1) // m) * m


def _round_down(x, m):
    return (x // m) * m


def _logreg_kernel(x_ref, w_ref, b_ref, o_ref, *, chunk):
    # x_ref : (tb, F) VMEM   w_ref : (1, F) VMEM   b_ref : (1, 1) SMEM   o_ref : (1, tb) VMEM
    w = w_ref[...]                                       # (1, F): broadcasts over chunk rows
    b = b_ref[0, 0]                                      # scalar bias from SMEM
    tb = x_ref.shape[0]
    # Static row-chunk loop: keeps the (rows, F) product small enough to stay in vregs
    # (explicitly "fuses" the multiply into the reduction instead of materialising a
    # (tb, F) f32 temporary), and all slice offsets are static -> cheap ref views.
    for r0 in range(0, tb, chunk):
        rows = min(chunk, tb - r0)
        x = x_ref[r0:r0 + rows, :]                       # (rows, F) static slice
        z = jnp.sum(x * w, axis=-1) + b                  # (rows,)  VPU mul + XLU lane-reduce
        y = 1.0 / (1.0 + jnp.exp(-z))                    # exact sigmoid (EUP exp; mem-bound so free)
        o_ref[0, r0:r0 + rows] = y.astype(o_ref.dtype)   # lane-dense store


def logistic_regression(x, w, b, *, tb=None):
    """sigmoid(x @ w + b). x: [B, F] f32, w: [F,1]/[1,F]/[F], b: 1-element. Returns [B, 1]."""
    B, F = x.shape
    x = x.astype(jnp.float32)
    w_row = jnp.asarray(w, jnp.float32).reshape(1, F)
    b_sc = jnp.asarray(b, jnp.float32).reshape(1, 1)

    f_pad = _round_up(F, _LANE)                  # lanes actually occupied by one row in VMEM
    # TODO(synk): for very large F (>~16K) this kernel would want an additional F-tiling
    # (accumulate z over feature chunks) instead of a single full-width row block.

    if tb is None:
        tb = max(_SUBLANE, _X_BUF_BYTES // (f_pad * 4))   # byte budget on lane-padded footprint
    if tb >= B:
        tb, n_tiles = B, 1                                 # single tile: blocks == full dims, no masking
    else:
        tb = max(_LANE, _round_down(tb, _LANE))            # multi-tile: (1, tb) out blocks need tb % 128 == 0
        if tb >= B:
            tb, n_tiles = B, 1
        else:
            n_tiles = pl.cdiv(B, tb)                       # ragged final tile handled by Pallas masking
    np_lanes = n_tiles * tb                                # lane extent of the (1, np_lanes) output row

    chunk = max(_SUBLANE, _round_down(_CHUNK_BYTES // (f_pad * 4), _SUBLANE))

    cost = pl.CostEstimate(                                # advisory; based on actually-DMA'd sizes
        flops=2 * n_tiles * tb * F,
        transcendentals=n_tiles * tb,
        bytes_accessed=4 * (n_tiles * tb * F + F + 1 + np_lanes),
    )

    out = pl.pallas_call(
        functools.partial(_logreg_kernel, chunk=chunk),
        out_shape=jax.ShapeDtypeStruct((1, np_lanes), jnp.float32),
        grid=(n_tiles,),
        in_specs=[
            pl.BlockSpec((tb, F), lambda i: (i, 0)),             # x batch tile, auto double-buffered
            pl.BlockSpec((1, F), lambda i: (0, 0)),              # weight row, resident across tiles
            pl.BlockSpec(memory_space=pltpu.MemorySpace.SMEM),   # scalar bias in SMEM
        ],
        out_specs=pl.BlockSpec((1, tb), lambda i: (0, i)),       # lane-dense output block
        compiler_params=pltpu.CompilerParams(
            dimension_semantics=("parallel",),                   # v7x: shard batch tiles over its 2 TCs
            vmem_limit_bytes=_VMEM_LIMIT,
        ),
        cost_estimate=cost,
    )(x, w_row, b_sc)

    return out[0, :B].reshape(B, 1)


if __name__ == "__main__":
    key = jax.random.PRNGKey(0)
    kx, kw, kb = jax.random.split(key, 3)

    batch, n_features = 8, 32
    x = jax.random.normal(kx, (batch, n_features), dtype=jnp.float32)
    # nn.Linear(n_features, 1) parameters (weight given here as [F, 1]).
    w = jax.random.normal(kw, (n_features, 1), dtype=jnp.float32) * 0.1
    b = jax.random.normal(kb, (1, 1), dtype=jnp.float32) * 0.1

    # Small, single-tile case (typical usage of the module).
    y_pred = logistic_regression(x, w, b)
    jax.block_until_ready(y_pred)
    y_ref = jax.nn.sigmoid(jnp.dot(x, w, precision=jax.lax.Precision.HIGHEST) + b)
    assert y_pred.shape == (batch, 1)
    assert jnp.allclose(y_pred, y_ref, atol=1e-4, rtol=1e-4)

    # Multi-tile + ragged batch (exercises partial-block masking, lane-dense output, parallel grid).
    x2 = jax.random.normal(kx, (300, n_features), dtype=jnp.float32)
    y2 = logistic_regression(x2, w, b, tb=128)
    jax.block_until_ready(y2)
    y2_ref = jax.nn.sigmoid(jnp.dot(x2, w, precision=jax.lax.Precision.HIGHEST) + b)
    assert y2.shape == (300, 1)
    assert jnp.allclose(y2, y2_ref, atol=1e-4, rtol=1e-4)

    print("KERNEL_OK")
</pallas_src>

<mosaic_0001>
module attributes {stable_mosaic.version = 11 : i64} {
  func.func @_logreg_kernel(%arg0: i32, %arg1: memref<8x32xf32, #tpu.memory_space<vmem>>, %arg2: memref<1x32xf32, #tpu.memory_space<vmem>>, %arg3: memref<1x1xf32, #tpu.memory_space<smem>>, %arg4: memref<1x8xf32, #tpu.memory_space<vmem>>) attributes {dimension_semantics = [#tpu.dimension_semantics<parallel>], iteration_bounds = array<i64: 1>, scalar_prefetch = 0 : i64, scratch_operands = 0 : i64, tpu.core_type = #tpu.core_type<tc>, window_params = [{transform_indices = @transform_0, window_bounds = array<i64: 8, 32>}, {pipeline_mode = #tpu.pipeline_mode<synchronous>, transform_indices = @transform_1, window_bounds = array<i64: 1, 32>}, {transform_indices = @transform_2, window_bounds = array<i64: 1, 1>}, {transform_indices = @transform_3, window_bounds = array<i64: 1, 8>}]} {
    %c0 = arith.constant 0 : index
    %c0_0 = arith.constant 0 : index
    %0 = vector.load %arg2[%c0, %c0_0] : memref<1x32xf32, #tpu.memory_space<vmem>>, vector<1x32xf32>
    %c0_1 = arith.constant 0 : index
    %c0_2 = arith.constant 0 : index
    %1 = memref.load %arg3[%c0_1, %c0_2] : memref<1x1xf32, #tpu.memory_space<smem>>
    %c0_3 = arith.constant 0 : index
    %c0_4 = arith.constant 0 : index
    %2 = vector.load %arg1[%c0_3, %c0_4] : memref<8x32xf32, #tpu.memory_space<vmem>>, vector<8x32xf32>
    %3 = vector.broadcast %0 : vector<1x32xf32> to vector<8x32xf32>
    %4 = arith.mulf %2, %3 : vector<8x32xf32>
    %cst = arith.constant dense<0.000000e+00> : vector<8xf32>
    %5 = vector.multi_reduction <add>, %4, %cst [1] : vector<8x32xf32> to vector<8xf32>
    %6 = vector.broadcast %1 : f32 to vector<8xf32>
    %7 = arith.addf %5, %6 : vector<8xf32>
    %cst_5 = arith.constant 0.000000e+00 : f32
    %8 = vector.broadcast %cst_5 : f32 to vector<8xf32>
    %9 = arith.subf %8, %7 : vector<8xf32>
    %10 = math.exp %9 : vector<8xf32>
    %cst_6 = arith.constant 1.000000e+00 : f32
    %11 = vector.broadcast %cst_6 : f32 to vector<8xf32>
    %12 = arith.addf %11, %10 : vector<8xf32>
    %cst_7 = arith.constant 1.000000e+00 : f32
    %13 = vector.broadcast %cst_7 : f32 to vector<8xf32>
    %14 = arith.divf %13, %12 : vector<8xf32>
    %c0_8 = arith.constant 0 : index
    %c0_9 = arith.constant 0 : index
    %15 = vector.load %arg4[%c0_8, %c0_9] : memref<1x8xf32, #tpu.memory_space<vmem>>, vector<1x8xf32>
    %16 = vector.shape_cast %15 : vector<1x8xf32> to vector<8xf32>
    %17 = vector.shape_cast %14 : vector<8xf32> to vector<1x8xf32>
    tpu.vector_store %arg4[%c0_8, %c0_9], %17 {strides = array<i32>} : memref<1x8xf32, #tpu.memory_space<vmem>>, vector<1x8xf32>,
    return
  }
  func.func @transform_0(%arg0: i32) -> (i32, i32) {
    %c0_i32 = arith.constant 0 : i32
    %c0_i32_0 = arith.constant 0 : i32
    return %arg0, %c0_i32 : i32, i32
  }
  func.func @transform_1(%arg0: i32) -> (i32, i32) {
    %c0_i32 = arith.constant 0 : i32
    %c0_i32_0 = arith.constant 0 : i32
    %c0_i32_1 = arith.constant 0 : i32
    return %c0_i32, %c0_i32_0 : i32, i32
  }
  func.func @transform_2(%arg0: i32) -> (i32, i32) {
    %c0_i32 = arith.constant 0 : i32
    %c0_i32_0 = arith.constant 0 : i32
    %c0_i32_1 = arith.constant 0 : i32
    return %c0_i32, %c0_i32_0 : i32, i32
  }
  func.func @transform_3(%arg0: i32) -> (i32, i32) {
    %c0_i32 = arith.constant 0 : i32
    %c0_i32_0 = arith.constant 0 : i32
    return %c0_i32, %arg0 : i32, i32
  }
}

</mosaic_0001>

<llo_original>
// kernel: tpu_custom_call.1
$region0: #{tpu_custom_call.1}
  #allocation0 [shape = 'u32[]', space=smem, size = 0x4, offset = 0x4, fixed_abs, tag = 'smem constant byte address 0x4 - core index']
  #allocation1 [shape = 'u32[144,128]{1,0:T(1,128)}', space=vmem, size = 0x12000, scoped, tag = 'internal scratch']
  #allocation2 [shape = 'f32[1,1]{1,0:T(1,128)S(6)}', space=smem, size = 0x200, scoped, tag = 'scoped memory for tpu_custom_call.1']
  %s0 = inlined_call_operand.hbm [shape: f32[8,32], index: 0, kind: input, shape index: {}]
  %s1 = inlined_call_operand.vmem [shape: f32[1,32], index: 1, kind: input, shape index: {}]
  %s2 = inlined_call_operand.<no memory space> [shape: f32[1,1], index: 2, kind: input, shape index: {}]
  %s3 = inlined_call_operand.hbm [shape: f32[1,8], index: 3, kind: output, shape index: {}]
  %s4 = sld [smem:[#allocation0]]
  $region26: #{tpu_custom_call.1} parent=0
    _
  %s6 = ssub.s32 1, %s4
  %s7 = scalar_select 0, %s6, %s4
  %8 = sst [smem:[#allocation2]] %s2
  $region1: #{tpu_custom_call.1} parent=0
    #allocation3 [shape = 'u8[4096]{0}', space=vmem, size = 0x1000, scoped, tag = 'input window, operand 0, single buffered']
    #allocation4 [shape = 's32[1]{0}', space=sflag, size = 0x4, scoped, tag = 'scoped memory for tpu_custom_call.1']
    #allocation5 [shape = 's32[1]{0}', space=sflag, size = 0x4, scoped, tag = 'scoped memory for tpu_custom_call.1']
    #allocation6 [shape = 'u8[512]{0}', space=vmem, size = 0x400, scoped, tag = 'output window, operand 0, single buffered']
    %9 = vsyncpa [#allocation4], 0
    %10 = vsyncpa [#allocation5], 0
    // Predicated region
    $region2: #{tpu_custom_call.1} parent=1 // pred_check
      _
    $region3: #{tpu_custom_call.1} parent=1 // pred_check_branch
      %12 = sbr.rel (0) target = $region5
    $region4: #{tpu_custom_call.1} parent=1 // pred_region
      %s14 = ssub.s32 128, 128
      %15 = vsyncadd [#allocation4], %s14
      %s17 = sshll.u32 [#allocation3], 4
      %s18 = int_to_ptr.vmem [resolvable:$true] %s17
      %20 = dma.hbm_to_vmem [thread:$0]  %s0, 128, %s18, [#allocation4]
    $region5: #{tpu_custom_call.1} parent=1 // pred_fallthru
      _
    // Predicated region
    $region6: #{tpu_custom_call.1} parent=1 // pred_check
      _
    $region7: #{tpu_custom_call.1} parent=1 // pred_check_branch
      %22 = sbr.rel (0) target = $region9
    $region8: #{tpu_custom_call.1} parent=1 // pred_region
      _
    $region9: #{tpu_custom_call.1} parent=1 // pred_fallthru
      _
    // Predicated region
    $region10: #{tpu_custom_call.1} parent=1 // pred_check
      _
    $region11: #{tpu_custom_call.1} parent=1 // pred_check_branch
      %24 = sbr.rel (0) target = $region13
    $region12: #{tpu_custom_call.1} parent=1 // pred_region
      _
    $region13: #{tpu_custom_call.1} parent=1 // pred_fallthru
      _
    // Predicated region
    $region14: #{tpu_custom_call.1} parent=1 // pred_check
      _
    $region15: #{tpu_custom_call.1} parent=1 // pred_check_branch
      %26 = sbr.rel (0) target = $region17
    $region16: #{tpu_custom_call.1} parent=1 // pred_region
      %27 = dma.done [#allocation4], 128
    $region17: #{tpu_custom_call.1} parent=1 // pred_fallthru
      _
    %v28 = vld [vmem:[%s1] sm:$0x1]
    %s29 = sld [smem:[#allocation2]]
    %v30 = vld [vmem:[#allocation3] sm:$0xff]
    %v32 = vlaneseq
    %v33 = vshrl.u32 %v32, 7
    %v34 = vsub.s32 0, %v33
    %v35 = vrot.slane %v28, %v34
    %v37 = vmul.f32 %v30, %v35
    %vm38 = vcmask 261120
    %v39 = vsel %vm38, %v37, 0.0
    %40 = vadd.xlane.f32.xlu0 %v39
    %v41 = vpop.xlane.xlu0 %40
    %v42 = vstv %s29
    %v43 = vadd.f32 %v41, %v42
    %v44 = vsub.f32 0.0, %v43
    %v45 = vmul.f32 %v44, 1.442695
    %v46 = vpow.pop %v45
    %v47 = vadd.f32 %v46, 1.0
    %v48 = vrcp.pop %v47
    %v49 = vmul.f32 1.0, %v48
    %v51 = vlaneseq
    %v52 = vand.u32 %v51, 127
    %v53 = vlaneseq
    %v54 = vshrl.u32 %v53, 7
    %v55 = vsub.s32 %v52, %v54
    %v56 = vrot.slane %v49, %v55
    %vm58 = vcmask 57344
    %59 = vst.msk [vmem:[#allocation6] sm:$0x1] %vm58, %v56
    // Predicated region
    $region18: #{tpu_custom_call.1} parent=1 // pred_check
      _
    $region19: #{tpu_custom_call.1} parent=1 // pred_check_branch
      %61 = sbr.rel (0) target = $region21
    $region20: #{tpu_custom_call.1} parent=1 // pred_region
      %s63 = ssub.s32 16, 16
      %64 = vsyncadd [#allocation5], %s63
      %s66 = sshll.u32 [#allocation6], 4
      %s67 = int_to_ptr.vmem [resolvable:$true] %s66
      %69 = dma.vmem_to_hbm [thread:$0]  %s67, 16, %s3, [#allocation5]
    $region21: #{tpu_custom_call.1} parent=1 // pred_fallthru
      _
    // Predicated region
    $region22: #{tpu_custom_call.1} parent=1 // pred_check
      _
    $region23: #{tpu_custom_call.1} parent=1 // pred_check_branch
      %71 = sbr.rel (0) target = $region25
    $region24: #{tpu_custom_call.1} parent=1 // pred_region
      %72 = dma.done [#allocation5], 16
    $region25: #{tpu_custom_call.1} parent=1 // pred_fallthru
      _
    %73 = vsyncpa [#allocation4], 1
    %74 = vsyncpa [#allocation5], 1

</llo_original>
